<compile_context>
chip_gen: v7x
topology: tpu7x:2x2x1
jax: 0.10.0
libtpu: 0.0.40
codegen_flags: <defaults>
</compile_context>

<pallas_src>
import functools

import jax
import jax.numpy as jnp
from jax import lax
from jax.experimental import pallas as pl
from jax.experimental.pallas import tpu as pltpu

GAMMA = 2.0  # module default


def _round_up(x, m):
    return (x + m - 1) // m * m


def _focal_loss_kernel(x_ref, t_ref, out_ref, acc_ref, *, n_valid, tile_n, gamma):
    # x_ref: (TILE_N, C) logits tile in VMEM; t_ref: (TILE_N, 1) int32 targets tile.
    i = pl.program_id(0)

    @pl.when(i == 0)
    def _init():
        acc_ref[...] = jnp.zeros_like(acc_ref)

    x = x_ref[...].astype(jnp.float32)            # (TILE_N, C), f32 compute (v5e-safe)
    t = t_ref[...]                                # (TILE_N, 1) int32

    # numerically-stable log-softmax denominator (per row)
    m = jnp.max(x, axis=-1, keepdims=True)                                # (TILE_N, 1)
    lse = m + jnp.log(jnp.sum(jnp.exp(x - m), axis=-1, keepdims=True))    # (TILE_N, 1)

    # gather logits[target] via one-hot compare (no dynamic gather on TPU)
    col = lax.broadcasted_iota(jnp.int32, x.shape, 1)                     # (TILE_N, C)
    sel = jnp.sum(jnp.where(col == t, x, 0.0), axis=-1, keepdims=True)    # (TILE_N, 1)

    # mask padded rows of the (padded) batch
    row = i * tile_n + lax.broadcasted_iota(jnp.int32, (tile_n, 1), 0)    # global row id
    ce_rows = jnp.where(row < n_valid, lse - sel, 0.0)                    # (TILE_N, 1)

    acc_ref[...] += jnp.sum(ce_rows, axis=0, keepdims=True)               # (1, 1)

    @pl.when(i == pl.num_programs(0) - 1)
    def _finalize():
        ce = acc_ref[...] / jnp.float32(n_valid)          # mean reduction (weight=None)
        pt = jnp.exp(-ce)
        one_minus_pt = 1.0 - pt
        g = float(gamma)
        if g.is_integer() and g >= 0:
            # integer power by repeated multiply: exact, no log(0) hazard (gamma=2 default)
            mod = jnp.ones_like(one_minus_pt)
            for _ in range(int(g)):
                mod = mod * one_minus_pt
        else:
            safe = jnp.maximum(one_minus_pt, jnp.float32(1e-30))
            mod = jnp.where(one_minus_pt > 0.0,
                            jnp.exp(jnp.float32(g) * jnp.log(safe)),
                            jnp.zeros_like(one_minus_pt))
        out_ref[...] = (mod * ce).astype(out_ref.dtype)


def focal_loss(logits, targets, gamma=GAMMA, *, max_tile_rows=512):
    """logits: (N, C) float; targets: (N,) int. Returns scalar float32 focal loss."""
    n, c = logits.shape
    t2d = targets.astype(jnp.int32).reshape(n, 1)

    # Tile sizing: multiple of 16 rows (bf16 sublane packing safe), cap per-tile
    # bytes ~4 MiB so double-buffered tiles fit comfortably in scoped VMEM on all
    # generations (v7x has only 64 MiB physical / 32 MiB scoped).
    bytes_per_row = max(c, 1) * 4  # f32 compute
    tile_n = max(16, min(int(max_tile_rows), (4 * 1024 * 1024) // bytes_per_row))
    tile_n = max(16, (tile_n // 16) * 16)
    tile_n = min(tile_n, _round_up(n, 16))

    # Pad N to a multiple of tile_n so blocks tile the array exactly; padded rows
    # are masked out inside the kernel.
    n_pad = _round_up(n, tile_n)
    if n_pad != n:
        logits = jnp.pad(logits, ((0, n_pad - n), (0, 0)))
        t2d = jnp.pad(t2d, ((0, n_pad - n), (0, 0)))
    num_tiles = n_pad // tile_n

    out = pl.pallas_call(
        functools.partial(_focal_loss_kernel, n_valid=n, tile_n=tile_n, gamma=gamma),
        out_shape=jax.ShapeDtypeStruct((1, 1), jnp.float32),
        grid_spec=pltpu.PrefetchScalarGridSpec(
            num_scalar_prefetch=0,
            grid=(num_tiles,),
            in_specs=[
                pl.BlockSpec((tile_n, c), lambda i: (i, 0)),   # logits tile (pipelined)
                pl.BlockSpec((tile_n, 1), lambda i: (i, 0)),   # targets tile
            ],
            out_specs=pl.BlockSpec((1, 1), lambda i: (0, 0)),  # resident scalar output
            scratch_shapes=[pltpu.VMEM((1, 1), jnp.float32)],  # running sum(lse - sel)
        ),
        compiler_params=pltpu.CompilerParams(
            dimension_semantics=("arbitrary",),                # serial accumulation
            vmem_limit_bytes=32 * 1024 * 1024,
        ),
        cost_estimate=pl.CostEstimate(
            flops=int(5 * n * c),
            transcendentals=int(n * c),
            bytes_accessed=int(n * c * jnp.dtype(logits.dtype).itemsize + n * 4 + 4),
        ),
    )(logits, t2d)
    return out[0, 0]


def _reference(logits, targets, gamma=GAMMA):
    # pure-JAX reference of the PyTorch forward
    x = logits.astype(jnp.float32)
    lse = jax.scipy.special.logsumexp(x, axis=-1)
    sel = jnp.take_along_axis(x, targets[:, None].astype(jnp.int32), axis=-1)[:, 0]
    ce = jnp.mean(lse - sel)
    pt = jnp.exp(-ce)
    return (1.0 - pt) ** gamma * ce


if __name__ == "__main__":
    key = jax.random.PRNGKey(0)

    # Case 1: small demo shape (single tile).
    k_x, k_t = jax.random.split(key)
    N1, C1 = 8, 4
    logits1 = jax.random.normal(k_x, (N1, C1), dtype=jnp.float32)
    targets1 = jax.random.randint(k_t, (N1,), 0, C1, dtype=jnp.int32)

    out1 = jax.block_until_ready(focal_loss(logits1, targets1))
    ref1 = _reference(logits1, targets1)
    assert jnp.allclose(out1, ref1, rtol=1e-5, atol=1e-5), (out1, ref1)

    # Case 2: multi-tile grid with a remainder tile (exercises accumulation + masking).
    k_x2, k_t2 = jax.random.split(jax.random.PRNGKey(1))
    N2, C2 = 40, 8
    logits2 = jax.random.normal(k_x2, (N2, C2), dtype=jnp.float32)
    targets2 = jax.random.randint(k_t2, (N2,), 0, C2, dtype=jnp.int32)

    out2 = jax.block_until_ready(focal_loss(logits2, targets2, max_tile_rows=16))
    ref2 = _reference(logits2, targets2)
    assert jnp.allclose(out2, ref2, rtol=1e-5, atol=1e-5), (out2, ref2)

    print("KERNEL_OK")
</pallas_src>

<mosaic_0001>
module attributes {stable_mosaic.version = 11 : i64} {
  func.func @_focal_loss_kernel(%arg0: i32, %arg1: memref<16x4xf32, #tpu.memory_space<vmem>>, %arg2: memref<16x1xi32, #tpu.memory_space<vmem>>, %arg3: memref<1x1xf32, #tpu.memory_space<vmem>>, %arg4: memref<1x1xf32, #tpu.memory_space<vmem>>) attributes {dimension_semantics = [#tpu.dimension_semantics<arbitrary>], iteration_bounds = array<i64: 1>, scalar_prefetch = 0 : i64, scratch_operands = 1 : i64, tpu.core_type = #tpu.core_type<tc>, window_params = [{transform_indices = @transform_0, window_bounds = array<i64: 16, 4>}, {transform_indices = @transform_1, window_bounds = array<i64: 16, 1>}, {pipeline_mode = #tpu.pipeline_mode<synchronous>, transform_indices = @transform_2, window_bounds = array<i64: 1, 1>}]} {
    %c0_i32 = arith.constant 0 : i32
    %0 = arith.cmpi eq, %arg0, %c0_i32 : i32
    %1 = arith.extui %0 : i1 to i32
    %c0_i32_0 = arith.constant 0 : i32
    %2 = arith.cmpi ne, %1, %c0_i32_0 : i32
    scf.if %2 {
      %cst_15 = arith.constant 0.000000e+00 : f32
      %38 = vector.broadcast %cst_15 : f32 to vector<1x1xf32>
      %c0_16 = arith.constant 0 : index
      %c0_17 = arith.constant 0 : index
      %39 = vector.load %arg4[%c0_16, %c0_17] : memref<1x1xf32, #tpu.memory_space<vmem>>, vector<1x1xf32>
      tpu.vector_store %arg4[%c0_16, %c0_17], %38 {strides = array<i32>} : memref<1x1xf32, #tpu.memory_space<vmem>>, vector<1x1xf32>,
    } else {
    }
    %c0 = arith.constant 0 : index
    %c0_1 = arith.constant 0 : index
    %3 = vector.load %arg1[%c0, %c0_1] : memref<16x4xf32, #tpu.memory_space<vmem>>, vector<16x4xf32>
    %c0_2 = arith.constant 0 : index
    %c0_3 = arith.constant 0 : index
    %4 = vector.load %arg2[%c0_2, %c0_3] : memref<16x1xi32, #tpu.memory_space<vmem>>, vector<16x1xi32>
    %cst = arith.constant dense<0xFF800000> : vector<16xf32>
    %5 = vector.multi_reduction <maximumf>, %3, %cst [1] : vector<16x4xf32> to vector<16xf32>
    %6 = vector.shape_cast %5 : vector<16xf32> to vector<16x1xf32>
    %7 = vector.broadcast %6 : vector<16x1xf32> to vector<16x4xf32>
    %8 = arith.subf %3, %7 : vector<16x4xf32>
    %9 = math.exp %8 : vector<16x4xf32>
    %cst_4 = arith.constant dense<0.000000e+00> : vector<16xf32>
    %10 = vector.multi_reduction <add>, %9, %cst_4 [1] : vector<16x4xf32> to vector<16xf32>
    %11 = vector.shape_cast %10 : vector<16xf32> to vector<16x1xf32>
    %12 = math.log %11 : vector<16x1xf32>
    %13 = arith.addf %6, %12 : vector<16x1xf32>
    %14 = tpu.iota {dimensions = array<i32: 1>} : vector<16x4xi32>
    %15 = vector.broadcast %4 : vector<16x1xi32> to vector<16x4xi32>
    %16 = arith.cmpi eq, %14, %15 : vector<16x4xi32>
    %cst_5 = arith.constant 0.000000e+00 : f32
    %17 = vector.broadcast %cst_5 : f32 to vector<16x4xf32>
    %18 = arith.select %16, %3, %17 : vector<16x4xi1>, vector<16x4xf32>
    %cst_6 = arith.constant dense<0.000000e+00> : vector<16xf32>
    %19 = vector.multi_reduction <add>, %18, %cst_6 [1] : vector<16x4xf32> to vector<16xf32>
    %20 = vector.shape_cast %19 : vector<16xf32> to vector<16x1xf32>
    %c16_i32 = arith.constant 16 : i32
    %21 = arith.muli %arg0, %c16_i32 : i32
    %22 = tpu.iota {dimensions = array<i32: 0>} : vector<16x1xi32>
    %23 = vector.broadcast %21 : i32 to vector<16x1xi32>
    %24 = arith.addi %23, %22 : vector<16x1xi32>
    %c8_i32 = arith.constant 8 : i32
    %25 = vector.broadcast %c8_i32 : i32 to vector<16x1xi32>
    %26 = arith.cmpi slt, %24, %25 : vector<16x1xi32>
    %27 = arith.subf %13, %20 : vector<16x1xf32>
    %cst_7 = arith.constant 0.000000e+00 : f32
    %28 = vector.broadcast %cst_7 : f32 to vector<16x1xf32>
    %29 = arith.select %26, %27, %28 : vector<16x1xi1>, vector<16x1xf32>
    %c0_8 = arith.constant 0 : index
    %c0_9 = arith.constant 0 : index
    %30 = vector.load %arg4[%c0_8, %c0_9] : memref<1x1xf32, #tpu.memory_space<vmem>>, vector<1x1xf32>
    %cst_10 = arith.constant dense<0.000000e+00> : vector<1xf32>
    %31 = vector.multi_reduction <add>, %29, %cst_10 [0] : vector<16x1xf32> to vector<1xf32>
    %32 = vector.shape_cast %31 : vector<1xf32> to vector<1x1xf32>
    %33 = arith.addf %30, %32 : vector<1x1xf32>
    %c0_11 = arith.constant 0 : index
    %c0_12 = arith.constant 0 : index
    %34 = vector.load %arg4[%c0_11, %c0_12] : memref<1x1xf32, #tpu.memory_space<vmem>>, vector<1x1xf32>
    tpu.vector_store %arg4[%c0_11, %c0_12], %33 {strides = array<i32>} : memref<1x1xf32, #tpu.memory_space<vmem>>, vector<1x1xf32>,
    %c0_i32_13 = arith.constant 0 : i32
    %35 = arith.cmpi eq, %arg0, %c0_i32_13 : i32
    %36 = arith.extui %35 : i1 to i32
    %c0_i32_14 = arith.constant 0 : i32
    %37 = arith.cmpi ne, %36, %c0_i32_14 : i32
    scf.if %37 {
      %c0_15 = arith.constant 0 : index
      %c0_16 = arith.constant 0 : index
      %38 = vector.load %arg4[%c0_15, %c0_16] : memref<1x1xf32, #tpu.memory_space<vmem>>, vector<1x1xf32>
      %cst_17 = arith.constant 8.000000e+00 : f32
      %39 = vector.broadcast %cst_17 : f32 to vector<1x1xf32>
      %40 = arith.divf %38, %39 : vector<1x1xf32>
      %cst_18 = arith.constant 0.000000e+00 : f32
      %41 = vector.broadcast %cst_18 : f32 to vector<1x1xf32>
      %42 = arith.subf %41, %40 : vector<1x1xf32>
      %43 = math.exp %42 : vector<1x1xf32>
      %cst_19 = arith.constant 1.000000e+00 : f32
      %44 = vector.broadcast %cst_19 : f32 to vector<1x1xf32>
      %45 = arith.subf %44, %43 : vector<1x1xf32>
      %cst_20 = arith.constant 1.000000e+00 : f32
      %46 = vector.broadcast %cst_20 : f32 to vector<1x1xf32>
      %47 = arith.mulf %46, %45 : vector<1x1xf32>
      %48 = arith.mulf %47, %45 : vector<1x1xf32>
      %49 = arith.mulf %48, %40 : vector<1x1xf32>
      %c0_21 = arith.constant 0 : index
      %c0_22 = arith.constant 0 : index
      %50 = vector.load %arg3[%c0_21, %c0_22] : memref<1x1xf32, #tpu.memory_space<vmem>>, vector<1x1xf32>
      tpu.vector_store %arg3[%c0_21, %c0_22], %49 {strides = array<i32>} : memref<1x1xf32, #tpu.memory_space<vmem>>, vector<1x1xf32>,
    } else {
    }
    return
  }
  func.func @transform_0(%arg0: i32) -> (i32, i32) {
    %c0_i32 = arith.constant 0 : i32
    %c0_i32_0 = arith.constant 0 : i32
    return %arg0, %c0_i32 : i32, i32
  }
  func.func @transform_1(%arg0: i32) -> (i32, i32) {
    %c0_i32 = arith.constant 0 : i32
    %c0_i32_0 = arith.constant 0 : i32
    return %arg0, %c0_i32 : i32, i32
  }
  func.func @transform_2(%arg0: i32) -> (i32, i32) {
    %c0_i32 = arith.constant 0 : i32
    %c0_i32_0 = arith.constant 0 : i32
    %c0_i32_1 = arith.constant 0 : i32
    return %c0_i32, %c0_i32_0 : i32, i32
  }
}

</mosaic_0001>

<llo_original>
// kernel: tpu_custom_call.1
$region0: #{tpu_custom_call.1}
  #allocation0 [shape = 'u32[]', space=smem, size = 0x4, offset = 0x4, fixed_abs, tag = 'smem constant byte address 0x4 - core index']
  #allocation1 [shape = 'u32[144,128]{1,0:T(1,128)}', space=vmem, size = 0x12000, scoped, tag = 'internal scratch']
  #allocation2 [shape = 'f32[1,1]{1,0:T(1,128)}', space=vmem, size = 0x200, scoped, tag = 'scratch operand']
  %s0 = inlined_call_operand.vmem [shape: f32[16,4], index: 0, kind: input, shape index: {}]
  %s1 = inlined_call_operand.vmem [shape: s32[16,1], index: 1, kind: input, shape index: {}]
  %s2 = inlined_call_operand.hbm [shape: f32[1,1], index: 2, kind: output, shape index: {}]
  %s3 = sld [smem:[#allocation0]]
  $region26: #{tpu_custom_call.1} parent=0
    _
  %s5 = ssub.s32 1, %s3
  %s6 = scalar_select 0, %s5, %s3
  $region1: #{tpu_custom_call.1} parent=0
    #allocation3 [shape = 'u8[512]{0}', space=vmem, size = 0x400, scoped, tag = 'output window, operand 0, single buffered']
    #allocation4 [shape = 's32[1]{0}', space=sflag, size = 0x4, scoped, tag = 'scoped memory for tpu_custom_call.1']
    %7 = vsyncpa [#allocation4], 0
    // Predicated region
    $region2: #{tpu_custom_call.1} parent=1 // pred_check
      _
    $region3: #{tpu_custom_call.1} parent=1 // pred_check_branch
      %9 = sbr.rel (0) target = $region5
    $region4: #{tpu_custom_call.1} parent=1 // pred_region
      _
    $region5: #{tpu_custom_call.1} parent=1 // pred_fallthru
      _
    // Predicated region
    $region6: #{tpu_custom_call.1} parent=1 // pred_check
      _
    $region7: #{tpu_custom_call.1} parent=1 // pred_check_branch
      %11 = sbr.rel (0) target = $region9
    $region8: #{tpu_custom_call.1} parent=1 // pred_region
      _
    $region9: #{tpu_custom_call.1} parent=1 // pred_fallthru
      _
    %p12 = scmp.eq.s32.totalorder 0, 0
    // Predicated region
    $region10: #{tpu_custom_call.1} parent=1 // pred_check
      %p13 = pneg %p12
    $region11: #{tpu_custom_call.1} parent=1 // pred_check_branch
      %15 = sbr.rel (%p13) target = $region13
    $region12: #{tpu_custom_call.1} parent=1 // pred_region
      %vm16 = vcmask 0
      %17 = vst.msk [vmem:[#allocation2] sm:$0x1] %vm16, 0.0
    $region13: #{tpu_custom_call.1} parent=1 // pred_fallthru
      _
    %v18 = vld [vmem:[%s0] sm:$0xff]
    %v19 = vld [vmem:[%s0 + $0x8] sm:$0xff]
    %v20 = vld [vmem:[%s1] sm:$0xff]
    %v21 = vld [vmem:[%s1 + $0x8] sm:$0xff]
    %vm22 = vcmask 31744
    %v23 = vsel %vm22, %v18, -inf
    %24 = vmax.xlane.f32.xlu0 %v23
    %v25 = vpop.xlane.xlu0 %24
    %v26 = vsel %vm22, %v19, -inf
    %27 = vmax.xlane.f32.xlu0 %v26
    %v28 = vpop.xlane.xlu0 %27
    %v29 = vsub.f32 %v18, %v25
    %v30 = vsub.f32 %v19, %v28
    %v31 = vmul.f32 %v29, 1.442695
    %v32 = vpow.pop %v31
    %v33 = vmul.f32 %v30, 1.442695
    %v34 = vpow.pop %v33
    %v35 = vsel %vm22, %v32, 0.0
    %36 = vadd.xlane.f32.xlu0 %v35
    %v37 = vpop.xlane.xlu0 %36
    %v38 = vsel %vm22, %v34, 0.0
    %39 = vadd.xlane.f32.xlu0 %v38
    %v40 = vpop.xlane.xlu0 %39
    %v41 = vlog2.pop %v37
    %v42 = vmul.f32 %v41, 0.6931472
    %v43 = vlog2.pop %v40
    %v44 = vmul.f32 %v43, 0.6931472
    %v45 = vadd.f32 %v25, %v42
    %v46 = vadd.f32 %v28, %v44
    %v47 = vlaneseq
    %v48 = vand.u32 %v47, 127
    %49 = vset.pattern.permute.xlu0 0
    %50 = vperm.xlu0 %49, %v20
    %v51 = vpop.permute.xlu0 %50
    %52 = vset.pattern.permute.xlu0 0
    %53 = vperm.xlu0 %52, %v21
    %v54 = vpop.permute.xlu0 %53
    %vm55 = vcmp.eq.s32.totalorder %v48, %v51
    %vm56 = vcmp.eq.s32.totalorder %v48, %v54
    %v57 = vsel %vm55, %v18, 0.0
    %v58 = vsel %vm56, %v19, 0.0
    %v59 = vsel %vm22, %v57, 0.0
    %60 = vadd.xlane.f32.xlu0 %v59
    %v61 = vpop.xlane.xlu0 %60
    %v62 = vsel %vm22, %v58, 0.0
    %63 = vadd.xlane.f32.xlu0 %v62
    %v64 = vpop.xlane.xlu0 %63
    %s65 = smul.u32 0, 16
    %v66 = vlaneseq
    %v67 = vshrl.u32 %v66, 7
    %v68 = vadd.s32 %v67, 8
    %v69 = vstv %s65
    %v70 = vadd.s32 %v69, %v67
    %v71 = vadd.s32 %v69, %v68
    %vm72 = vcmp.lt.s32.totalorder %v70, 8
    %vm73 = vcmp.lt.s32.totalorder %v71, 8
    %v74 = vsub.f32 %v45, %v61
    %v75 = vsub.f32 %v46, %v64
    %v76 = vsel %vm72, %v74, 0.0
    %v77 = vsel %vm73, %v75, 0.0
    %v78 = vld [vmem:[#allocation2] sm:$0x1]
    %v79 = vadd.f32 %v76, %v77
    %v80 = vrot.slane %v79, 4
    %v81 = vadd.f32 %v79, %v80
    %v82 = vrot.slane %v81, 2
    %v83 = vadd.f32 %v81, %v82
    %v84 = vrot.slane %v83, 1
    %v85 = vadd.f32 %v83, %v84
    %v86 = vadd.f32 %v78, %v85
    %vm87 = vcmask 0
    %88 = vst.msk [vmem:[#allocation2] sm:$0x1] %vm87, %v86
    // Predicated region
    $region14: #{tpu_custom_call.1} parent=1 // pred_check
      %p89 = pneg %p12
    $region15: #{tpu_custom_call.1} parent=1 // pred_check_branch
      %91 = sbr.rel (%p89) target = $region17
    $region16: #{tpu_custom_call.1} parent=1 // pred_region
      %v92 = vld [vmem:[#allocation2] sm:$0x1]
      %v93 = vrcp.pop 8.0
      %v94 = vmul.f32 %v92, %v93
      %v95 = vsub.f32 0.0, %v94
      %v96 = vmul.f32 %v95, 1.442695
      %v97 = vpow.pop %v96
      %v98 = vsub.f32 1.0, %v97
      %v99 = vmul.f32 %v98, %v98
      %v100 = vmul.f32 %v99, %v94
      %101 = vst.msk [vmem:[#allocation3] sm:$0x1] %vm87, %v100
    $region17: #{tpu_custom_call.1} parent=1 // pred_fallthru
      _
    // Predicated region
    $region18: #{tpu_custom_call.1} parent=1 // pred_check
      _
    $region19: #{tpu_custom_call.1} parent=1 // pred_check_branch
      %103 = sbr.rel (0) target = $region21
    $region20: #{tpu_custom_call.1} parent=1 // pred_region
      %s105 = ssub.s32 16, 16
      %106 = vsyncadd [#allocation4], %s105
      %s108 = sshll.u32 [#allocation3], 4
      %s109 = int_to_ptr.vmem [resolvable:$true] %s108
      %111 = dma.vmem_to_hbm [thread:$0]  %s109, 16, %s2, [#allocation4]
    $region21: #{tpu_custom_call.1} parent=1 // pred_fallthru
      _
    // Predicated region
    $region22: #{tpu_custom_call.1} parent=1 // pred_check
      _
    $region23: #{tpu_custom_call.1} parent=1 // pred_check_branch
      %113 = sbr.rel (0) target = $region25
    $region24: #{tpu_custom_call.1} parent=1 // pred_region
      %114 = dma.done [#allocation4], 16
    $region25: #{tpu_custom_call.1} parent=1 // pred_fallthru
      _
    %115 = vsyncpa [#allocation4], 1

</llo_original>
